<compile_context>
chip_gen: v5e
topology: v5e:2x2
jax: 0.10.0
libtpu: 0.0.40
codegen_flags: <defaults>
</compile_context>

<pallas_src>
import functools

import jax
import jax.numpy as jnp
from jax import lax
from jax.experimental import pallas as pl
from jax.experimental.pallas import tpu as pltpu


# -----------------------------------------------------------------------------
# Kernel: one grid step == one image (H rows of the lane-dense (W*C) slab).
# -----------------------------------------------------------------------------
def _bottleneck_kernel(x_ref, w1_ref, b1_ref, w2_ref, b2_ref, w3_ref, b3_ref,
                       o_ref, *, H):
    rows = x_ref.shape[0]                      # == H (block is exactly one image)
    x_bf = x_ref[...]                          # bf16 (rows, W*Cin), lane-dense

    # ---- conv1 (1x1, BN folded) + ReLU: one block-diagonal matmul ----
    h1 = jnp.dot(x_bf, w1_ref[...], preferred_element_type=jnp.float32)
    h1 = jnp.maximum(h1 + b1_ref[...], 0.0)    # (rows, W*P) f32

    # ---- conv2 (3x3, BN folded) + ReLU ----
    # dy shift along H is a sublane roll; rows reading across the top/bottom
    # image border (padding=1 in H) are zeroed via an in-kernel iota mask.
    # Padding=1 in W is encoded inside the banded block-Toeplitz weight.
    y = lax.broadcasted_iota(jnp.int32, h1.shape, 0) % H
    h1_up = jnp.where(y == 0, 0.0, pltpu.roll(h1, shift=1, axis=0))          # row j <- h1[j-1]
    h1_dn = jnp.where(y == H - 1, 0.0, pltpu.roll(h1, shift=rows - 1, axis=0))  # row j <- h1[j+1]
    # Single fused K = 3*W*P matmul (instead of three K = W*P matmuls).
    lhs = jnp.concatenate([h1_up, h1, h1_dn], axis=1).astype(jnp.bfloat16)   # (rows, 3*W*P)
    h2 = jnp.dot(lhs, w2_ref[...], preferred_element_type=jnp.float32)
    h2 = jnp.maximum(h2 + b2_ref[...], 0.0)    # (rows, W*P) f32

    # ---- conv3 (1x1, BN folded) ----
    h3 = jnp.dot(h2.astype(jnp.bfloat16), w3_ref[...],
                 preferred_element_type=jnp.float32)
    h3 = h3 + b3_ref[...]                      # (rows, W*Cout)

    # ---- residual (downsample=None -> identity == x) + ReLU ----
    o_ref[...] = jnp.maximum(h3 + x_bf.astype(jnp.float32), 0.0)


# -----------------------------------------------------------------------------
# Host-side parameter preparation: run ONCE at module init, not per forward.
# -----------------------------------------------------------------------------
def _fold_bn(gamma, beta, mean, var, eps):
    scale = gamma / jnp.sqrt(var + eps)
    shift = beta - mean * scale
    return scale, shift


def prepare_params(w_conv1, w_conv2, w_conv3, bn1, bn_c, bn2, W, eps=1e-5):
    """Builds the fused kernel weights from PyTorch OIHW conv weights + BN stats."""
    s1, b1 = _fold_bn(*bn1, eps)
    s2, b2 = _fold_bn(*bn_c, eps)
    s3, b3 = _fold_bn(*bn2, eps)

    # BN scales folded into conv weights (per output channel).
    w1s = jnp.transpose(w_conv1[:, :, 0, 0], (1, 0)) * s1[None, :]          # (Cin, P)
    w2s = jnp.transpose(w_conv2, (2, 3, 1, 0)) * s2[None, None, None, :]    # (3,3,P,P)
    w3s = jnp.transpose(w_conv3[:, :, 0, 0], (1, 0)) * s3[None, :]          # (P, Cout)

    eye_w = jnp.eye(W, dtype=jnp.float32)
    # 1x1 convs on the (W*C) lane axis == block-diagonal matmuls.
    w1_blk = jnp.kron(eye_w, w1s).astype(jnp.bfloat16)                      # (W*Cin, W*P)
    w3_blk = jnp.kron(eye_w, w3s).astype(jnp.bfloat16)                      # (W*P, W*Cout)
    # 3x3 conv: per kernel row dy, a banded block-Toeplitz matrix applying the
    # three dx taps with zero padding in W; stacked along K for ONE fused dot.
    w2_blk = jnp.concatenate([
        sum(jnp.kron(jnp.eye(W, k=1 - dx, dtype=jnp.float32), w2s[dy, dx])
            for dx in range(3))
        for dy in range(3)], axis=0).astype(jnp.bfloat16)                   # (3*W*P, W*P)

    # BN shifts, tiled over W to match the (W*C) lane axis (kept f32).
    b1_t = jnp.tile(b1, W)[None, :].astype(jnp.float32)     # (1, W*P)
    b2_t = jnp.tile(b2, W)[None, :].astype(jnp.float32)     # (1, W*P)
    b3_t = jnp.tile(b3, W)[None, :].astype(jnp.float32)     # (1, W*Cout)

    return (w1_blk, b1_t, w2_blk, b2_t, w3_blk, b3_t)


# -----------------------------------------------------------------------------
# Forward: NCHW in / NCHW out.  (Layout passes kept for drop-in semantics; if
# the surrounding model consumes the lane-dense slab directly, drop them.)
# -----------------------------------------------------------------------------
def convnext_bottleneck(x_nchw, params):
    N, Cin, H, W = x_nchw.shape
    w1_blk, b1_t, w2_blk, b2_t, w3_blk, b3_t = params
    WCin, WP = w1_blk.shape
    WCout = w3_blk.shape[1]
    assert WCin == W * Cin and WCout == WCin, (
        "identity skip (downsample=None) requires inplanes == planes*expansion")
    # TODO(synk): stride>1 / downsample (skip_conv + skip_bn) path not implemented.

    # Lane-dense 2-D slab: rows = (n, h), lanes = (w, c); bf16 halves x DMA bytes.
    x2d = jnp.transpose(x_nchw, (0, 2, 3, 1)).reshape(N * H, WCin)
    x2d = x2d.astype(jnp.bfloat16)

    NH = N * H
    flops = 2 * NH * (WCin * WP + 3 * WP * WP + WP * WCout)
    bytes_accessed = (x2d.size * 2 + NH * WCout * 4
                      + (w1_blk.size + w2_blk.size + w3_blk.size) * 2
                      + (b1_t.size + b2_t.size + b3_t.size) * 4)

    def resident(shape):
        # Weight / bias operand: constant block index -> loaded once, stays resident.
        return pl.BlockSpec(shape, lambda i: (0,) * len(shape))

    grid_spec = pltpu.PrefetchScalarGridSpec(
        num_scalar_prefetch=0,
        grid=(N,),                                   # one image per step
        in_specs=[
            pl.BlockSpec((H, WCin), lambda i: (i, 0)),   # x rows for image i
            resident(w1_blk.shape), resident(b1_t.shape),
            resident(w2_blk.shape), resident(b2_t.shape),
            resident(w3_blk.shape), resident(b3_t.shape),
        ],
        out_specs=pl.BlockSpec((H, WCout), lambda i: (i, 0)),
    )

    out2d = pl.pallas_call(
        functools.partial(_bottleneck_kernel, H=H),
        out_shape=jax.ShapeDtypeStruct((NH, WCout), jnp.float32),
        grid_spec=grid_spec,
        compiler_params=pltpu.CompilerParams(
            dimension_semantics=("parallel",)),      # v7x: both TCs split the images
        cost_estimate=pl.CostEstimate(
            flops=flops, transcendentals=0, bytes_accessed=bytes_accessed),
    )(x2d, w1_blk, b1_t, w2_blk, b2_t, w3_blk, b3_t)

    return jnp.transpose(out2d.reshape(N, H, W, WCout // W), (0, 3, 1, 2))


# -----------------------------------------------------------------------------
# Pure-JAX NCHW reference mirroring the PyTorch forward (eval-mode BN).
# -----------------------------------------------------------------------------
def ref_forward_nchw(x, w_conv1, w_conv2, w_conv3, bn1, bn_c, bn2, eps=1e-5):
    def conv(xx, w, padding=0):
        return lax.conv_general_dilated(
            xx, w, (1, 1), [(padding, padding)] * 2,
            dimension_numbers=('NCHW', 'OIHW', 'NCHW'),
            precision=lax.Precision.HIGHEST)

    def bn(xx, p):
        g, b, m, v = p
        c = lambda a: a[None, :, None, None]
        return (xx - c(m)) / jnp.sqrt(c(v) + eps) * c(g) + c(b)

    identity = x
    out = jax.nn.relu(bn(conv(x, w_conv1), bn1))
    out = jax.nn.relu(bn(conv(out, w_conv2, padding=1), bn_c))  # ConvNextConv
    out = bn(conv(out, w_conv3), bn2)
    return jax.nn.relu(out + identity)


if __name__ == "__main__":
    eps = 1e-5
    N, H, W = 2, 8, 8
    planes = 4
    expansion = 4
    inplanes = planes * expansion   # so the identity residual add is valid

    key = jax.random.PRNGKey(0)
    ks = jax.random.split(key, 16)

    # Input in PyTorch NCHW layout.
    x_nchw = jax.random.normal(ks[0], (N, inplanes, H, W), jnp.float32)

    # Conv weights in PyTorch (O, I, kH, kW) layout, deterministic init.
    w_conv1 = 0.1 * jax.random.normal(ks[1], (planes, inplanes, 1, 1), jnp.float32)
    w_conv2 = 0.1 * jax.random.normal(ks[2], (planes, planes, 3, 3), jnp.float32)
    w_conv3 = 0.1 * jax.random.normal(ks[3], (planes * expansion, planes, 1, 1), jnp.float32)

    def bn_params(kg, kb, km, kv, c):
        gamma = 1.0 + 0.1 * jax.random.normal(kg, (c,), jnp.float32)
        beta = 0.1 * jax.random.normal(kb, (c,), jnp.float32)
        mean = 0.05 * jax.random.normal(km, (c,), jnp.float32)
        var = jax.random.uniform(kv, (c,), jnp.float32, 0.5, 1.5)
        return gamma, beta, mean, var

    bn1 = bn_params(ks[4], ks[5], ks[6], ks[7], planes)
    bn_c = bn_params(ks[8], ks[9], ks[10], ks[11], planes)        # ConvNextConv's BN
    bn2 = bn_params(ks[12], ks[13], ks[14], ks[15], planes * expansion)

    # Build fused weights ONCE (module init), jit the forward path only.
    params = jax.tree_util.tree_map(
        jax.block_until_ready,
        prepare_params(w_conv1, w_conv2, w_conv3, bn1, bn_c, bn2, W, eps))
    fwd = jax.jit(convnext_bottleneck)

    out = fwd(x_nchw, params)
    jax.block_until_ready(out)

    ref = ref_forward_nchw(x_nchw, w_conv1, w_conv2, w_conv3, bn1, bn_c, bn2, eps)
    assert out.shape == ref.shape == (N, planes * expansion, H, W)
    # Kernel uses bf16 MXU inputs / bf16 activations vs. the f32 HIGHEST-precision
    # reference, so the tolerance is sized for bf16 rounding through 3 conv stages.
    max_err = jnp.max(jnp.abs(out - ref))
    assert jnp.allclose(out, ref, atol=5e-2, rtol=5e-2), f"max abs err {max_err}"
    print("KERNEL_OK")
</pallas_src>

<mosaic_0001>
module attributes {stable_mosaic.version = 11 : i64} {
  func.func @_bottleneck_kernel(%arg0: i32, %arg1: memref<8x128xbf16, #tpu.memory_space<vmem>>, %arg2: memref<128x32xbf16, #tpu.memory_space<vmem>>, %arg3: memref<1x32xf32, #tpu.memory_space<vmem>>, %arg4: memref<96x32xbf16, #tpu.memory_space<vmem>>, %arg5: memref<1x32xf32, #tpu.memory_space<vmem>>, %arg6: memref<32x128xbf16, #tpu.memory_space<vmem>>, %arg7: memref<1x128xf32, #tpu.memory_space<vmem>>, %arg8: memref<8x128xf32, #tpu.memory_space<vmem>>) attributes {dimension_semantics = [#tpu.dimension_semantics<parallel>], iteration_bounds = array<i64: 2>, scalar_prefetch = 0 : i64, scratch_operands = 0 : i64, tpu.core_type = #tpu.core_type<tc>, window_params = [{transform_indices = @transform_0, window_bounds = array<i64: 8, 128>}, {pipeline_mode = #tpu.pipeline_mode<synchronous>, transform_indices = @transform_1, window_bounds = array<i64: 128, 32>}, {pipeline_mode = #tpu.pipeline_mode<synchronous>, transform_indices = @transform_2, window_bounds = array<i64: 1, 32>}, {pipeline_mode = #tpu.pipeline_mode<synchronous>, transform_indices = @transform_3, window_bounds = array<i64: 96, 32>}, {pipeline_mode = #tpu.pipeline_mode<synchronous>, transform_indices = @transform_4, window_bounds = array<i64: 1, 32>}, {pipeline_mode = #tpu.pipeline_mode<synchronous>, transform_indices = @transform_5, window_bounds = array<i64: 32, 128>}, {pipeline_mode = #tpu.pipeline_mode<synchronous>, transform_indices = @transform_6, window_bounds = array<i64: 1, 128>}, {transform_indices = @transform_7, window_bounds = array<i64: 8, 128>}]} {
    %c0 = arith.constant 0 : index
    %c0_0 = arith.constant 0 : index
    %0 = vector.load %arg1[%c0, %c0_0] : memref<8x128xbf16, #tpu.memory_space<vmem>>, vector<8x128xbf16>
    %c0_1 = arith.constant 0 : index
    %c0_2 = arith.constant 0 : index
    %1 = vector.load %arg2[%c0_1, %c0_2] : memref<128x32xbf16, #tpu.memory_space<vmem>>, vector<128x32xbf16>
    %cst = arith.constant dense<0.000000e+00> : vector<8x32xf32>
    %2 = tpu.matmul %0, %1, %cst {dimension_numbers = #tpu.dot_dimension_numbers<[1], [0], [0], [1], [0, 0, 1, 1], [], []>} : vector<8x128xbf16>, vector<128x32xbf16>, vector<8x32xf32> -> vector<8x32xf32>
    %c0_3 = arith.constant 0 : index
    %c0_4 = arith.constant 0 : index
    %3 = vector.load %arg3[%c0_3, %c0_4] : memref<1x32xf32, #tpu.memory_space<vmem>>, vector<1x32xf32>
    %4 = vector.broadcast %3 : vector<1x32xf32> to vector<8x32xf32>
    %5 = arith.addf %2, %4 : vector<8x32xf32>
    %cst_5 = arith.constant 0.000000e+00 : f32
    %6 = vector.broadcast %cst_5 : f32 to vector<8x32xf32>
    %7 = arith.maximumf %5, %6 : vector<8x32xf32>
    %8 = tpu.iota {dimensions = array<i32: 0>} : vector<8x32xi32>
    %c8_i32 = arith.constant 8 : i32
    %c0_i32 = arith.constant 0 : i32
    %9 = arith.cmpi eq, %c8_i32, %c0_i32 : i32
    %c1_i32 = arith.constant 1 : i32
    %10 = arith.select %9, %c1_i32, %c8_i32 : i32
    %11 = vector.broadcast %10 : i32 to vector<8x32xi32>
    %12 = arith.remsi %8, %11 : vector<8x32xi32>
    %c0_i32_6 = arith.constant 0 : i32
    %13 = vector.broadcast %c0_i32_6 : i32 to vector<8x32xi32>
    %14 = arith.cmpi ne, %12, %13 : vector<8x32xi32>
    %c0_i32_7 = arith.constant 0 : i32
    %15 = vector.broadcast %c0_i32_7 : i32 to vector<8x32xi32>
    %16 = arith.cmpi slt, %12, %15 : vector<8x32xi32>
    %c0_i32_8 = arith.constant 0 : i32
    %17 = arith.cmpi slt, %10, %c0_i32_8 : i32
    %18 = vector.broadcast %17 : i1 to vector<8x32xi1>
    %19 = vector.broadcast %18 : vector<8x32xi1> to vector<8x32xi1>
    %20 = arith.xori %16, %19 : vector<8x32xi1>
    %21 = arith.andi %20, %14 : vector<8x32xi1>
    %22 = vector.broadcast %10 : i32 to vector<8x32xi32>
    %23 = arith.addi %12, %22 : vector<8x32xi32>
    %24 = arith.select %21, %23, %12 : vector<8x32xi1>, vector<8x32xi32>
    %c0_i32_9 = arith.constant 0 : i32
    %25 = vector.broadcast %c0_i32_9 : i32 to vector<8x32xi32>
    %26 = arith.cmpi eq, %24, %25 : vector<8x32xi32>
    %c1_i32_10 = arith.constant 1 : i32
    %27 = tpu.dynamic_rotate %7 by %c1_i32_10 dim 0 : vector<8x32xf32>, i32 -> vector<8x32xf32>
    %cst_11 = arith.constant 0.000000e+00 : f32
    %28 = vector.broadcast %cst_11 : f32 to vector<8x32xf32>
    %29 = arith.select %26, %28, %27 : vector<8x32xi1>, vector<8x32xf32>
    %c7_i32 = arith.constant 7 : i32
    %30 = vector.broadcast %c7_i32 : i32 to vector<8x32xi32>
    %31 = arith.cmpi eq, %24, %30 : vector<8x32xi32>
    %c7_i32_12 = arith.constant 7 : i32
    %32 = tpu.dynamic_rotate %7 by %c7_i32_12 dim 0 : vector<8x32xf32>, i32 -> vector<8x32xf32>
    %cst_13 = arith.constant 0.000000e+00 : f32
    %33 = vector.broadcast %cst_13 : f32 to vector<8x32xf32>
    %34 = arith.select %31, %33, %32 : vector<8x32xi1>, vector<8x32xf32>
    %35 = tpu.concatenate %29, %7, %34 in 1 : vector<8x32xf32>, vector<8x32xf32>, vector<8x32xf32> -> vector<8x96xf32>
    %36 = arith.truncf %35 : vector<8x96xf32> to vector<8x96xbf16>
    %c0_14 = arith.constant 0 : index
    %c0_15 = arith.constant 0 : index
    %37 = vector.load %arg4[%c0_14, %c0_15] : memref<96x32xbf16, #tpu.memory_space<vmem>>, vector<96x32xbf16>
    %cst_16 = arith.constant dense<0.000000e+00> : vector<8x32xf32>
    %38 = tpu.matmul %36, %37, %cst_16 {dimension_numbers = #tpu.dot_dimension_numbers<[1], [0], [0], [1], [0, 0, 1, 1], [], []>} : vector<8x96xbf16>, vector<96x32xbf16>, vector<8x32xf32> -> vector<8x32xf32>
    %c0_17 = arith.constant 0 : index
    %c0_18 = arith.constant 0 : index
    %39 = vector.load %arg5[%c0_17, %c0_18] : memref<1x32xf32, #tpu.memory_space<vmem>>, vector<1x32xf32>
    %40 = vector.broadcast %39 : vector<1x32xf32> to vector<8x32xf32>
    %41 = arith.addf %38, %40 : vector<8x32xf32>
    %cst_19 = arith.constant 0.000000e+00 : f32
    %42 = vector.broadcast %cst_19 : f32 to vector<8x32xf32>
    %43 = arith.maximumf %41, %42 : vector<8x32xf32>
    %44 = arith.truncf %43 : vector<8x32xf32> to vector<8x32xbf16>
    %c0_20 = arith.constant 0 : index
    %c0_21 = arith.constant 0 : index
    %45 = vector.load %arg6[%c0_20, %c0_21] : memref<32x128xbf16, #tpu.memory_space<vmem>>, vector<32x128xbf16>
    %cst_22 = arith.constant dense<0.000000e+00> : vector<8x128xf32>
    %46 = tpu.matmul %44, %45, %cst_22 {dimension_numbers = #tpu.dot_dimension_numbers<[1], [0], [0], [1], [0, 0, 1, 1], [], []>} : vector<8x32xbf16>, vector<32x128xbf16>, vector<8x128xf32> -> vector<8x128xf32>
    %c0_23 = arith.constant 0 : index
    %c0_24 = arith.constant 0 : index
    %47 = vector.load %arg7[%c0_23, %c0_24] : memref<1x128xf32, #tpu.memory_space<vmem>>, vector<1x128xf32>
    %48 = vector.broadcast %47 : vector<1x128xf32> to vector<8x128xf32>
    %49 = arith.addf %46, %48 : vector<8x128xf32>
    %50 = arith.extf %0 : vector<8x128xbf16> to vector<8x128xf32>
    %51 = arith.addf %49, %50 : vector<8x128xf32>
    %cst_25 = arith.constant 0.000000e+00 : f32
    %52 = vector.broadcast %cst_25 : f32 to vector<8x128xf32>
    %53 = arith.maximumf %51, %52 : vector<8x128xf32>
    %c0_26 = arith.constant 0 : index
    %c0_27 = arith.constant 0 : index
    %54 = vector.load %arg8[%c0_26, %c0_27] : memref<8x128xf32, #tpu.memory_space<vmem>>, vector<8x128xf32>
    tpu.vector_store %arg8[%c0_26, %c0_27], %53 {strides = array<i32>} : memref<8x128xf32, #tpu.memory_space<vmem>>, vector<8x128xf32>,
    return
  }
  func.func @transform_0(%arg0: i32) -> (i32, i32) {
    %c0_i32 = arith.constant 0 : i32
    %c0_i32_0 = arith.constant 0 : i32
    return %arg0, %c0_i32 : i32, i32
  }
  func.func @transform_1(%arg0: i32) -> (i32, i32) {
    %c0_i32 = arith.constant 0 : i32
    %c0_i32_0 = arith.constant 0 : i32
    %c0_i32_1 = arith.constant 0 : i32
    return %c0_i32, %c0_i32_0 : i32, i32
  }
  func.func @transform_2(%arg0: i32) -> (i32, i32) {
    %c0_i32 = arith.constant 0 : i32
    %c0_i32_0 = arith.constant 0 : i32
    %c0_i32_1 = arith.constant 0 : i32
    return %c0_i32, %c0_i32_0 : i32, i32
  }
  func.func @transform_3(%arg0: i32) -> (i32, i32) {
    %c0_i32 = arith.constant 0 : i32
    %c0_i32_0 = arith.constant 0 : i32
    %c0_i32_1 = arith.constant 0 : i32
    return %c0_i32, %c0_i32_0 : i32, i32
  }
  func.func @transform_4(%arg0: i32) -> (i32, i32) {
    %c0_i32 = arith.constant 0 : i32
    %c0_i32_0 = arith.constant 0 : i32
    %c0_i32_1 = arith.constant 0 : i32
    return %c0_i32, %c0_i32_0 : i32, i32
  }
  func.func @transform_5(%arg0: i32) -> (i32, i32) {
    %c0_i32 = arith.constant 0 : i32
    %c0_i32_0 = arith.constant 0 : i32
    %c0_i32_1 = arith.constant 0 : i32
    return %c0_i32, %c0_i32_0 : i32, i32
  }
  func.func @transform_6(%arg0: i32) -> (i32, i32) {
    %c0_i32 = arith.constant 0 : i32
    %c0_i32_0 = arith.constant 0 : i32
    %c0_i32_1 = arith.constant 0 : i32
    return %c0_i32, %c0_i32_0 : i32, i32
  }
  func.func @transform_7(%arg0: i32) -> (i32, i32) {
    %c0_i32 = arith.constant 0 : i32
    %c0_i32_0 = arith.constant 0 : i32
    return %arg0, %c0_i32 : i32, i32
  }
}

</mosaic_0001>

<llo_original>
// kernel: convnext_bottleneck.1
$region0: #{convnext_bottleneck.1}
  #allocation0 [shape = 'u32[]', space=smem, size = 0x4, offset = 0x4, fixed_abs, tag = 'smem constant byte address 0x4 - core index']
  #allocation1 [shape = 'u32[72,128]{1,0:T(1,128)}', space=vmem, size = 0x9000, scoped, tag = 'internal scratch']
  %s0 = inlined_call_operand.vmem [shape: bf16[16,128], index: 0, kind: input, shape index: {}]
  %s1 = inlined_call_operand.vmem [shape: bf16[128,32], index: 1, kind: input, shape index: {}]
  %s2 = inlined_call_operand.vmem [shape: f32[1,32], index: 2, kind: input, shape index: {}]
  %s3 = inlined_call_operand.vmem [shape: bf16[96,32], index: 3, kind: input, shape index: {}]
  %s4 = inlined_call_operand.vmem [shape: f32[1,32], index: 4, kind: input, shape index: {}]
  %s5 = inlined_call_operand.vmem [shape: bf16[32,128], index: 5, kind: input, shape index: {}]
  %s6 = inlined_call_operand.vmem [shape: f32[1,128], index: 6, kind: input, shape index: {}]
  %s7 = inlined_call_operand.vmem [shape: f32[16,128], index: 7, kind: output, shape index: {}]
  %s8 = sld [smem:[#allocation0]]
  $region61: #{convnext_bottleneck.1} parent=0
    _
  %s10 = ssub.s32 1, %s8
  %s11 = scalar_select 0, %s10, %s8
  loop: start=0, step=1, limit=4
  $region2: #{convnext_bottleneck.1} parent=0 // loop_pre_header
    _
  $region3: #{convnext_bottleneck.1} parent=0 // loop_header
    %s13 = sphi 0, %s17
    %p14 = scmp.ge.s32.totalorder %s13, 4
    %s23 = sphi 0, %s25
    %s26 = sphi 0, %s23
    %s27 = sphi 0, %s26
    %s43 = sphi 0, %s27
    %s47 = sphi 0, %s47
    %s49 = sphi 0, %s47
    %s50 = sphi 0, %s49
    %s64 = sphi 0, %s50
    %s68 = sphi 0, %s68
    %s70 = sphi 0, %s68
    %s71 = sphi 0, %s70
    %s85 = sphi 0, %s71
    %s89 = sphi 0, %s89
    %s91 = sphi 0, %s89
    %s92 = sphi 0, %s91
    %s106 = sphi 0, %s92
    %s110 = sphi 0, %s110
    %s112 = sphi 0, %s110
    %s113 = sphi 0, %s112
    %s127 = sphi 0, %s113
    %s131 = sphi 0, %s131
    %s133 = sphi 0, %s131
    %s134 = sphi 0, %s133
    %s148 = sphi 0, %s134
    %s152 = sphi 0, %s152
    %s154 = sphi 0, %s152
    %s155 = sphi 0, %s154
    %s169 = sphi 0, %s155
    %s175 = sphi 0, %s177
    %s178 = sphi 0, %s175
    %s179 = sphi 0, %s178
    %s195 = sphi 0, %s179
  $region4: #{convnext_bottleneck.1} parent=0 // loop_header_branch
    %16 = sbr.rel (%p14) target = $region8
  $region5: #{convnext_bottleneck.1} parent=0 // loop_body
    %s18 = ssub.s32 %s13, 1
    %s19 = ssub.s32 %s13, 2
    %s20 = sadd.s32 %s13, 1
    %s21 = ssub.s32 %s13, %s20
    %p22 = scmp.eq.s32.totalorder %s21, 0
    %s24 = sadd.s32 %s23, 1
    %s25 = scalar_select %p22, %s23, %s24
    %p28 = pneg %p22
    %p29 = scmp.eq.s32.totalorder %s13, 1
    %p30 = por %p28, %p29
    %p31 = scmp.ne.s32.totalorder %s23, %s26
    %p32 = scmp.eq.s32.totalorder %s13, 0
    %p33 = por %p31, %p32
    %p34 = scmp.ne.s32.totalorder %s23, %s26
    %p35 = scmp.eq.s32.totalorder %s18, 1
    %p36 = por %p34, %p35
    %p37 = scmp.ne.s32.totalorder %s26, %s27
    %p38 = scmp.eq.s32.totalorder %s18, 0
    %p39 = por %p37, %p38
    %p40 = scmp.ne.s32.totalorder %s26, %s27
    %p41 = scmp.eq.s32.totalorder %s19, 1
    %p42 = por %p40, %p41
    %p44 = scmp.ne.s32.totalorder %s27, %s43
    %p45 = scmp.eq.s32.totalorder %s19, 0
    %p46 = por %p44, %p45
    %s48 = sadd.s32 %s47, 1
    %p51 = scmp.eq.s32.totalorder %s13, 1
    %p52 = scmp.ne.s32.totalorder %s47, %s49
    %p53 = scmp.eq.s32.totalorder %s13, 0
    %p54 = por %p52, %p53
    %p55 = scmp.ne.s32.totalorder %s47, %s49
    %p56 = scmp.eq.s32.totalorder %s18, 1
    %p57 = por %p55, %p56
    %p58 = scmp.ne.s32.totalorder %s49, %s50
    %p59 = scmp.eq.s32.totalorder %s18, 0
    %p60 = por %p58, %p59
    %p61 = scmp.ne.s32.totalorder %s49, %s50
    %p62 = scmp.eq.s32.totalorder %s19, 1
    %p63 = por %p61, %p62
    %p65 = scmp.ne.s32.totalorder %s50, %s64
    %p66 = scmp.eq.s32.totalorder %s19, 0
    %p67 = por %p65, %p66
    %s69 = sadd.s32 %s68, 1
    %p72 = scmp.eq.s32.totalorder %s13, 1
    %p73 = scmp.ne.s32.totalorder %s68, %s70
    %p74 = scmp.eq.s32.totalorder %s13, 0
    %p75 = por %p73, %p74
    %p76 = scmp.ne.s32.totalorder %s68, %s70
    %p77 = scmp.eq.s32.totalorder %s18, 1
    %p78 = por %p76, %p77
    %p79 = scmp.ne.s32.totalorder %s70, %s71
    %p80 = scmp.eq.s32.totalorder %s18, 0
    %p81 = por %p79, %p80
    %p82 = scmp.ne.s32.totalorder %s70, %s71
    %p83 = scmp.eq.s32.totalorder %s19, 1
    %p84 = por %p82, %p83
    %p86 = scmp.ne.s32.totalorder %s71, %s85
    %p87 = scmp.eq.s32.totalorder %s19, 0
    %p88 = por %p86, %p87
    %s90 = sadd.s32 %s89, 1
    %p93 = scmp.eq.s32.totalorder %s13, 1
    %p94 = scmp.ne.s32.totalorder %s89, %s91
    %p95 = scmp.eq.s32.totalorder %s13, 0
    %p96 = por %p94, %p95
    %p97 = scmp.ne.s32.totalorder %s89, %s91
    %p98 = scmp.eq.s32.totalorder %s18, 1
    %p99 = por %p97, %p98
    %p100 = scmp.ne.s32.totalorder %s91, %s92
    %p101 = scmp.eq.s32.totalorder %s18, 0
    %p102 = por %p100, %p101
    %p103 = scmp.ne.s32.totalorder %s91, %s92
    %p104 = scmp.eq.s32.totalorder %s19, 1
    %p105 = por %p103, %p104
    %p107 = scmp.ne.s32.totalorder %s92, %s106
    %p108 = scmp.eq.s32.totalorder %s19, 0
    %p109 = por %p107, %p108
    %s111 = sadd.s32 %s110, 1
    %p114 = scmp.eq.s32.totalorder %s13, 1
    %p115 = scmp.ne.s32.totalorder %s110, %s112
    %p116 = scmp.eq.s32.totalorder %s13, 0
    %p117 = por %p115, %p116
    %p118 = scmp.ne.s32.totalorder %s110, %s112
    %p119 = scmp.eq.s32.totalorder %s18, 1
    %p120 = por %p118, %p119
    %p121 = scmp.ne.s32.totalorder %s112, %s113
    %p122 = scmp.eq.s32.totalorder %s18, 0
    %p123 = por %p121, %p122
    %p124 = scmp.ne.s32.totalorder %s112, %s113
    %p125 = scmp.eq.s32.totalorder %s19, 1
    %p126 = por %p124, %p125
    %p128 = scmp.ne.s32.totalorder %s113, %s127
    %p129 = scmp.eq.s32.totalorder %s19, 0
    %p130 = por %p128, %p129
    %s132 = sadd.s32 %s131, 1
    %p135 = scmp.eq.s32.totalorder %s13, 1
    %p136 = scmp.ne.s32.totalorder %s131, %s133
    %p137 = scmp.eq.s32.totalorder %s13, 0
    %p138 = por %p136, %p137
    %p139 = scmp.ne.s32.totalorder %s131, %s133
    %p140 = scmp.eq.s32.totalorder %s18, 1
    %p141 = por %p139, %p140
    %p142 = scmp.ne.s32.totalorder %s133, %s134
    %p143 = scmp.eq.s32.totalorder %s18, 0
    %p144 = por %p142, %p143
    %p145 = scmp.ne.s32.totalorder %s133, %s134
    %p146 = scmp.eq.s32.totalorder %s19, 1
    %p147 = por %p145, %p146
    %p149 = scmp.ne.s32.totalorder %s134, %s148
    %p150 = scmp.eq.s32.totalorder %s19, 0
    %p151 = por %p149, %p150
    %s153 = sadd.s32 %s152, 1
    %p156 = scmp.eq.s32.totalorder %s13, 1
    %p157 = scmp.ne.s32.totalorder %s152, %s154
    %p158 = scmp.eq.s32.totalorder %s13, 0
    %p159 = por %p157, %p158
    %p160 = scmp.ne.s32.totalorder %s152, %s154
    %p161 = scmp.eq.s32.totalorder %s18, 1
    %p162 = por %p160, %p161
    %p163 = scmp.ne.s32.totalorder %s154, %s155
    %p164 = scmp.eq.s32.totalorder %s18, 0
    %p165 = por %p163, %p164
    %p166 = scmp.ne.s32.totalorder %s154, %s155
    %p167 = scmp.eq.s32.totalorder %s19, 1
    %p168 = por %p166, %p167
    %p170 = scmp.ne.s32.totalorder %s155, %s169
    %p171 = scmp.eq.s32.totalorder %s19, 0
    %p172 = por %p170, %p171
    %s173 = ssub.s32 %s13, %s20
    %p174 = scmp.eq.s32.totalorder %s173, 0
    %s176 = sadd.s32 %s175, 1
    %s177 = scalar_select %p174, %s175, %s176
    %p180 = pneg %p174
    %p181 = scmp.eq.s32.totalorder %s13, 1
    %p182 = por %p180, %p181
    %p183 = scmp.ne.s32.totalorder %s175, %s178
    %p184 = scmp.eq.s32.totalorder %s13, 0
    %p185 = por %p183, %p184
    %p186 = scmp.ne.s32.totalorder %s175, %s178
    %p187 = scmp.eq.s32.totalorder %s18, 1
    %p188 = por %p186, %p187
    %p189 = scmp.ne.s32.totalorder %s178, %s179
    %p190 = scmp.eq.s32.totalorder %s18, 0
    %p191 = por %p189, %p190
    %p192 = scmp.ne.s32.totalorder %s178, %s179
    %p193 = scmp.eq.s32.totalorder %s19, 1
    %p194 = por %p192, %p193
    %p196 = scmp.ne.s32.totalorder %s179, %s195
    %p197 = scmp.eq.s32.totalorder %s19, 0
    %p198 = por %p196, %p197
    %p199 = scmp.le.s32.totalorder 1, %s13
    %p200 = scmp.lt.s32.totalorder %s13, 3
    %p201 = pnand %p199, %p200
    %p202 = pneg %p201
    // Predicated region
    $region9: #{convnext_bottleneck.1} parent=5 // pred_check
      _
    $region10: #{convnext_bottleneck.1} parent=5 // pred_check_branch
      %204 = sbr.rel (%p201) target = $region12
    $region11: #{convnext_bottleneck.1} parent=5 // pred_region
      %s205 = ssub.s32 %s13, 1
      // Predicated region
      $region13: #{convnext_bottleneck.1} parent=11 // pred_check
        %p206 = pneg %p60
      $region14: #{convnext_bottleneck.1} parent=11 // pred_check_branch
        %208 = sbr.rel (%p206) target = $region16
      $region15: #{convnext_bottleneck.1} parent=11 // pred_region
        _
      $region16: #{convnext_bottleneck.1} parent=11 // pred_fallthru
        _
      // Predicated region
      $region17: #{convnext_bottleneck.1} parent=11 // pred_check
        %p209 = pneg %p81
      $region18: #{convnext_bottleneck.1} parent=11 // pred_check_branch
        %211 = sbr.rel (%p209) target = $region20
      $region19: #{convnext_bottleneck.1} parent=11 // pred_region
        _
      $region20: #{convnext_bottleneck.1} parent=11 // pred_fallthru
        _
      // Predicated region
      $region21: #{convnext_bottleneck.1} parent=11 // pred_check
        %p212 = pneg %p102
      $region22: #{convnext_bottleneck.1} parent=11 // pred_check_branch
        %214 = sbr.rel (%p212) target = $region24
      $region23: #{convnext_bottleneck.1} parent=11 // pred_region
        _
      $region24: #{convnext_bottleneck.1} parent=11 // pred_fallthru
        _
      // Predicated region
      $region25: #{convnext_bottleneck.1} parent=11 // pred_check
        %p215 = pneg %p123
      $region26: #{convnext_bottleneck.1} parent=11 // pred_check_branch
        %217 = sbr.rel (%p215) target = $region28
      $region27: #{convnext_bottleneck.1} parent=11 // pred_region
        _
      $region28: #{convnext_bottleneck.1} parent=11 // pred_fallthru
        _
      // Predicated region
      $region29: #{convnext_bottleneck.1} parent=11 // pred_check
        %p218 = pneg %p144
      $region30: #{convnext_bottleneck.1} parent=11 // pred_check_branch
        %220 = sbr.rel (%p218) target = $region32
      $region31: #{convnext_bottleneck.1} parent=11 // pred_region
        _
      $region32: #{convnext_bottleneck.1} parent=11 // pred_fallthru
        _
      // Predicated region
      $region33: #{convnext_bottleneck.1} parent=11 // pred_check
        %p221 = pneg %p165
      $region34: #{convnext_bottleneck.1} parent=11 // pred_check_branch
        %223 = sbr.rel (%p221) target = $region36
      $region35: #{convnext_bottleneck.1} parent=11 // pred_region
        _
      $region36: #{convnext_bottleneck.1} parent=11 // pred_fallthru
        _
    $region12: #{convnext_bottleneck.1} parent=5 // pred_fallthru
      _
    %p224 = scmp.lt.s32.totalorder %s13, 2
    // Predicated region
    $region37: #{convnext_bottleneck.1} parent=5 // pred_check
      %p225 = pneg %p224
    $region38: #{convnext_bottleneck.1} parent=5 // pred_check_branch
      %227 = sbr.rel (%p225) target = $region40
    $region39: #{convnext_bottleneck.1} parent=5 // pred_region
      // Predicated region
      $region41: #{convnext_bottleneck.1} parent=39 // pred_check
        %p228 = pneg %p33
      $region42: #{convnext_bottleneck.1} parent=39 // pred_check_branch
        %230 = sbr.rel (%p228) target = $region44
      $region43: #{convnext_bottleneck.1} parent=39 // pred_region
        %p231 = scmp.lt.s32.totalorder %s13, 1
        %s232 = scalar_select %p231, %s13, 1
        %s233 = smul.addr %s232, 4
        %s234 = scalar_lea.vmem %s0, %s233
      $region44: #{convnext_bottleneck.1} parent=39 // pred_fallthru
        _
    $region40: #{convnext_bottleneck.1} parent=5 // pred_fallthru
      _
    %p235 = scmp.le.s32.totalorder 1, %s13
    %p236 = scmp.lt.s32.totalorder %s13, 3
    %p237 = pnand %p235, %p236
    %p238 = pneg %p237
    // Predicated region
    $region45: #{convnext_bottleneck.1} parent=5 // pred_check
      _
    $region46: #{convnext_bottleneck.1} parent=5 // pred_check_branch
      %240 = sbr.rel (%p237) target = $region48
    $region47: #{convnext_bottleneck.1} parent=5 // pred_region
      %s241 = ssub.s32 %s13, 1
      %p242 = scmp.lt.s32.totalorder %s18, 1
      %s243 = scalar_select %p242, %s18, 1
      %s244 = smul.addr %s243, 4
      %s245 = scalar_lea.vmem %s0, %s244
      %p246 = pneg %p39
      %p247 = pneg %p36
      %p248 = pneg %p60
      %p249 = pneg %p57
      %p250 = pneg %p81
      %p251 = pneg %p78
      %p252 = pneg %p102
      %p253 = pneg %p99
      %p254 = pneg %p123
      %p255 = pneg %p120
      %p256 = pneg %p144
      %p257 = pneg %p141
      %p258 = pneg %p165
      %p259 = pneg %p162
      %p260 = pneg %p191
      %p261 = pneg %p188
      %p262 = scmp.lt.s32.totalorder %s18, 1
      %s263 = scalar_select %p262, %s18, 1
      %s264 = smul.addr %s263, 8
      %s265 = scalar_lea.vmem %s7, %s264
      %p266 = scmp.lt.s32.totalorder %s18, 1
      %s267 = scalar_select %p266, %s18, 1
      %s268 = smul.addr %s267, 4
      %s269 = scalar_lea.vmem %s0, %s268
      %p270 = scmp.lt.s32.totalorder %s18, 1
      %s271 = scalar_select %p270, %s18, 1
      %s272 = smul.addr %s271, 8
      %s273 = scalar_lea.vmem %s7, %s272
      %v275 = vld [vmem:[%s269] sm:$0xf]
      %v276 = vld [vmem:[%s1] sm:$0xf]
      %v277 = vld [vmem:[%s1 + $0x4] sm:$0xf]
      %v278 = vld [vmem:[%s1 + $0x8] sm:$0xf]
      %v279 = vld [vmem:[%s1 + $0xc] sm:$0xf]
      %v280 = vld [vmem:[%s1 + $0x10] sm:$0xf]
      %v281 = vld [vmem:[%s1 + $0x14] sm:$0xf]
      %v282 = vld [vmem:[%s1 + $0x18] sm:$0xf]
      %v283 = vld [vmem:[%s1 + $0x1c] sm:$0xf]
      %v284 = vld [vmem:[%s1 + $0x20] sm:$0xf]
      %v285 = vld [vmem:[%s1 + $0x24] sm:$0xf]
      %v286 = vld [vmem:[%s1 + $0x28] sm:$0xf]
      %v287 = vld [vmem:[%s1 + $0x2c] sm:$0xf]
      %v288 = vld [vmem:[%s1 + $0x30] sm:$0xf]
      %v289 = vld [vmem:[%s1 + $0x34] sm:$0xf]
      %v290 = vld [vmem:[%s1 + $0x38] sm:$0xf]
      %v291 = vld [vmem:[%s1 + $0x3c] sm:$0xf]
      %v292 = vld [vmem:[%s2] sm:$0x1]
      %v294 = vperm.slane %v292, 0
      %v312 = vunpack.c.l.b16 %v276
      %v313 = vunpack.c.l.b16 %v277
      %v314 = vunpack.c.l.b16 %v278
      %v315 = vunpack.c.l.b16 %v279
      %v316 = vunpack.c.l.b16 %v280
      %v317 = vunpack.c.l.b16 %v281
      %v318 = vunpack.c.l.b16 %v282
      %v319 = vunpack.c.l.b16 %v283
      %v320 = vunpack.c.l.b16 %v284
      %v321 = vunpack.c.l.b16 %v285
      %v322 = vunpack.c.l.b16 %v286
      %v323 = vunpack.c.l.b16 %v287
      %v324 = vunpack.c.l.b16 %v288
      %v325 = vunpack.c.l.b16 %v289
      %v326 = vunpack.c.l.b16 %v290
      %v327 = vunpack.c.l.b16 %v291
      %v328 = vpack.c.b16 %v313, %v312
      %v329 = vpack.c.b16 %v315, %v314
      %v330 = vpack.c.b16 %v317, %v316
      %v331 = vpack.c.b16 %v319, %v318
      %v332 = vpack.c.b16 %v321, %v320
      %v333 = vpack.c.b16 %v323, %v322
      %v334 = vpack.c.b16 %v325, %v324
      %v335 = vpack.c.b16 %v327, %v326
      %344 = vmatpush.bf16.msra.mxu0 %v335
      %345 = vmatpush.bf16.msra.mxu0 %v334
      %346 = vmatpush.bf16.msra.mxu0 %v333
      %347 = vmatpush.bf16.msra.mxu0 %v332
      %348 = vmatpush.bf16.msra.mxu0 %v331
      %349 = vmatpush.bf16.msra.mxu0 %v330
      %350 = vmatpush.bf16.msra.mxu0 %v329
      %351 = vmatpush.bf16.msra.mxu0 %v328
      %352 = vmatmul.bf16.gmra.mxu0 %v275
      %v353 = vpop.f32.mrf.mxu0
      %v354 = vadd.f32 %v294, %v353
      %v355 = vpop.f32.mrf.mxu0
      %356 = vdwg.mxu0
      %v357 = vmax.f32 %v354, 0.0
      %v358 = vlaneseq
      %v359 = vshrl.u32 %v358, 7
      %vm360 = vcmp.lt.s32.totalorder %v359, 0
      %v361 = vsub.s32 0, %v359
      %v362 = vsel %vm360, %v361, %v359
      %v363 = vshrl.u32 %v362, 3
      %v364 = vand.u32 %v362, 7
      %v365 = vsub.s32 0, %v364
      %v366 = vsel %vm360, %v365, %v364
      %vm367 = vcmp.ne.s32.totalorder %v366, 0
      %vm368 = vcmp.lt.s32.totalorder %v366, 0
      %vm369 = vmand %vm368, %vm367
      %v370 = vadd.s32 %v366, 8
      %v371 = vsel %vm369, %v370, %v366
      %vm372 = vcmp.eq.s32.totalorder %v371, 0
      %v373 = vrot.slane %v357, 7
      %v374 = vsel %vm372, 0.0, %v373
      %vm375 = vcmp.eq.s32.totalorder %v371, 7
      %v376 = vrot.slane %v357, 1
      %v377 = vsel %vm375, 0.0, %v376
      %379 = vrot.lane.b32.xlu0 %v357, 32
      %v380 = vpop.permute.xlu0 %379
      %383 = vrot.lane.b32.xlu0 %v377, 64
      %v384 = vpop.permute.xlu0 %383
      %vm386 = vcmask 261120
      %v387 = vsel %vm386, %v374, %v380
      %vm388 = vcmask 523264
      %v389 = vsel %vm388, %v387, %v384
      %v390 = vpack.c.bf16 %v389, %v389
      %v391 = vld [vmem:[%s3] sm:$0xf]
      %v392 = vld [vmem:[%s3 + $0x4] sm:$0xf]
      %v393 = vld [vmem:[%s3 + $0x8] sm:$0xf]
      %v394 = vld [vmem:[%s3 + $0xc] sm:$0xf]
      %v395 = vld [vmem:[%s3 + $0x10] sm:$0xf]
      %v396 = vld [vmem:[%s3 + $0x14] sm:$0xf]
      %v397 = vld [vmem:[%s3 + $0x18] sm:$0xf]
      %v398 = vld [vmem:[%s3 + $0x1c] sm:$0xf]
      %v399 = vld [vmem:[%s3 + $0x20] sm:$0xf]
      %v400 = vld [vmem:[%s3 + $0x24] sm:$0xf]
      %v401 = vld [vmem:[%s3 + $0x28] sm:$0xf]
      %v402 = vld [vmem:[%s3 + $0x2c] sm:$0xf]
      %v403 = vld [vmem:[%s4] sm:$0x1]
      %v405 = vperm.slane %v403, 0
      %v419 = vunpack.c.l.b16 %v391
      %v420 = vunpack.c.l.b16 %v392
      %v421 = vunpack.c.l.b16 %v393
      %v422 = vunpack.c.l.b16 %v394
      %v423 = vunpack.c.l.b16 %v395
      %v424 = vunpack.c.l.b16 %v396
      %v425 = vunpack.c.l.b16 %v397
      %v426 = vunpack.c.l.b16 %v398
      %v427 = vunpack.c.l.b16 %v399
      %v428 = vunpack.c.l.b16 %v400
      %v429 = vunpack.c.l.b16 %v401
      %v430 = vunpack.c.l.b16 %v402
      %v431 = vpack.c.b16 %v420, %v419
      %v432 = vpack.c.b16 %v422, %v421
      %v433 = vpack.c.b16 %v424, %v423
      %v434 = vpack.c.b16 %v426, %v425
      %v435 = vpack.c.b16 %v428, %v427
      %v436 = vpack.c.b16 %v430, %v429
      %vm443 = vcmask 785408
      %v445 = vsel %vm443, %v390, 0
      %447 = vmatpush.bf16.msra.mxu0 0
      %448 = vmatpush.bf16.msra.mxu0 0
      %449 = vmatpush.bf16.msra.mxu0 %v436
      %450 = vmatpush.bf16.msra.mxu0 %v435
      %451 = vmatpush.bf16.msra.mxu0 %v434
      %452 = vmatpush.bf16.msra.mxu0 %v433
      %453 = vmatpush.bf16.msra.mxu0 %v432
      %454 = vmatpush.bf16.msra.mxu0 %v431
      %455 = vmatmul.bf16.gmra.mxu0 %v445
      %v456 = vpop.f32.mrf.mxu0
      %v457 = vadd.f32 %v405, %v456
      %v458 = vpop.f32.mrf.mxu0
      %459 = vdwg.mxu0
      %v460 = vmax.f32 %v457, 0.0
      %v461 = vpack.c.bf16 %v460, %v460
      %v462 = vld [vmem:[%s5] sm:$0xf]
      %v463 = vld [vmem:[%s5 + $0x4] sm:$0xf]
      %v464 = vld [vmem:[%s5 + $0x8] sm:$0xf]
      %v465 = vld [vmem:[%s5 + $0xc] sm:$0xf]
      %v466 = vld [vmem:[%s6] sm:$0x1]
      %v468 = vperm.slane %v466, 0
      %v474 = vunpack.c.l.b16 %v462
      %v475 = vunpack.c.l.b16 %v463
      %v476 = vunpack.c.l.b16 %v464
      %v477 = vunpack.c.l.b16 %v465
      %v478 = vpack.c.b16 %v475, %v474
      %v479 = vpack.c.b16 %v477, %v476
      %v483 = vsel %vm386, %v461, 0
      %485 = vmatpush.bf16.msra.mxu0 0
      %486 = vmatpush.bf16.msra.mxu0 0
      %487 = vmatpush.bf16.msra.mxu0 0
      %488 = vmatpush.bf16.msra.mxu0 0
      %489 = vmatpush.bf16.msra.mxu0 0
      %490 = vmatpush.bf16.msra.mxu0 0
      %491 = vmatpush.bf16.msra.mxu0 %v479
      %492 = vmatpush.bf16.msra.mxu0 %v478
      %493 = vmatmul.bf16.gmra.mxu0 %v483
      %v494 = vpop.f32.mrf.mxu0
      %v495 = vadd.f32 %v468, %v494
      %v496 = vpop.f32.mrf.mxu0
      %497 = vdwg.mxu0
      %v498 = vunpack.c.l.bf16 %v275
      %v499 = vadd.f32 %v495, %v498
      %v500 = vmax.f32 %v499, 0.0
      %501 = vst [vmem:[%s273] sm:$0xff] %v500
      %p502 = scmp.lt.s32.totalorder %s18, 1
      %s503 = scalar_select %p502, %s18, 1
      %s504 = smul.addr %s503, 8
      %s505 = scalar_lea.vmem %s7, %s504
      // Predicated region
      $region49: #{convnext_bottleneck.1} parent=47 // pred_check
        %p506 = pneg %p188
      $region50: #{convnext_bottleneck.1} parent=47 // pred_check_branch
        %508 = sbr.rel (%p506) target = $region52
      $region51: #{convnext_bottleneck.1} parent=47 // pred_region
        _
      $region52: #{convnext_bottleneck.1} parent=47 // pred_fallthru
        _
    $region48: #{convnext_bottleneck.1} parent=5 // pred_fallthru
      _
    %p509 = scmp.le.s32.totalorder 2, %s13
    // Predicated region
    $region53: #{convnext_bottleneck.1} parent=5 // pred_check
      %p510 = pneg %p509
    $region54: #{convnext_bottleneck.1} parent=5 // pred_check_branch
      %512 = sbr.rel (%p510) target = $region56
    $region55: #{convnext_bottleneck.1} parent=5 // pred_region
      %s513 = ssub.s32 %s13, 2
      // Predicated region
      $region57: #{convnext_bottleneck.1} parent=55 // pred_check
        %p514 = pneg %p194
      $region58: #{convnext_bottleneck.1} parent=55 // pred_check_branch
        %516 = sbr.rel (%p514) target = $region60
      $region59: #{convnext_bottleneck.1} parent=55 // pred_region
        %p517 = scmp.lt.s32.totalorder %s19, 1
        %s518 = scalar_select %p517, %s19, 1
        %s519 = smul.addr %s518, 8
        %s520 = scalar_lea.vmem %s7, %s519
      $region60: #{convnext_bottleneck.1} parent=55 // pred_fallthru
        _
    $region56: #{convnext_bottleneck.1} parent=5 // pred_fallthru
      _
  $region6: #{convnext_bottleneck.1} parent=0 // loop_footer
    %s17 = sadd.s32 1, %s13
  $region7: #{convnext_bottleneck.1} parent=0 // loop_footer_branch
    %12 = sbr.rel target = $region3
  $region8: #{convnext_bottleneck.1} parent=0 // loop_exit
    _

</llo_original>
